<compile_context>
chip_gen: v5e
topology: v5e:2x2
jax: 0.10.0
libtpu: 0.0.40
codegen_flags: <defaults>
</compile_context>

<pallas_src>
import functools

import jax
import jax.numpy as jnp
from jax import lax
from jax.experimental import pallas as pl
from jax.experimental.pallas import tpu as pltpu

_LANE = 128
_EPS = 1e-5


def _round_up(n, m):
    return ((n + m - 1) // m) * m


def _apply_activation(y, act):
    """Static activation choice (baked in at trace time). Works on jnp values."""
    if act == "relu":
        return jnp.maximum(y, 0.0)
    if act == "tanh":
        return jnp.tanh(y)
    if act == "leaky_relu":
        return jnp.where(y >= 0.0, y, 0.01 * y)
    if act == "sigmoid":
        return jax.nn.sigmoid(y)
    if act == "selu":
        return jax.nn.selu(y)
    if act == "softplus":
        return jax.nn.softplus(y)
    if act == "identity":
        return y
    raise ValueError(f"unknown activation {act!r}")


def _fused_mlp_kernel(x_ref, w_ref, bnp_ref, o_ref, *, layer_acts, batch, eps):
    """All MLP layers fused: (Linear -> BatchNorm1d(train) -> act) x L.

    x_ref  : [B, D]      activations, D = max feature width padded to 128 lanes
    w_ref  : [L, D, D]   layer l weight (pre-transposed [in, out]) in
                         [:in_l, :out_l]; zero elsewhere
    bnp_ref: [3*L, D]    rows (3l, 3l+1, 3l+2) = bias, gamma, beta of layer l
                         (zero in padded lanes)
    o_ref  : [B, D]      final-layer output lives in [:, :out_last]
    """
    inv_b = 1.0 / float(batch)
    h = x_ref[...]
    bnp = bnp_ref[...]
    for l, act in enumerate(layer_acts):   # static unroll: shapes are static
        bias = bnp[3 * l + 0:3 * l + 1, :]
        gamma = bnp[3 * l + 1:3 * l + 2, :]
        beta = bnp[3 * l + 2:3 * l + 3, :]
        # Linear on the MXU, f32 accumulation.
        y = jnp.dot(h, w_ref[l], preferred_element_type=jnp.float32) + bias
        # BatchNorm1d (training): one-pass batch stats, biased variance.
        mean = jnp.sum(y, axis=0, keepdims=True) * inv_b
        ex2 = jnp.sum(y * y, axis=0, keepdims=True) * inv_b
        var = jnp.maximum(ex2 - mean * mean, 0.0)   # clamp cancellation
        y = (y - mean) * lax.rsqrt(var + eps) * gamma + beta
        h = _apply_activation(y, act)
    o_ref[...] = h


def _pack_params(params, d_pad):
    """Pack per-layer (w, b, gamma, beta) into two lane-padded arrays."""
    num_layers = len(params)
    w_packed = jnp.zeros((num_layers, d_pad, d_pad), jnp.float32)
    bnp = jnp.zeros((3 * num_layers, d_pad), jnp.float32)
    for l, (w, b, gamma, beta) in enumerate(params):
        in_l, out_l = w.shape
        w_packed = w_packed.at[l, :in_l, :out_l].set(w)
        bnp = bnp.at[3 * l + 0, :out_l].set(b)
        bnp = bnp.at[3 * l + 1, :out_l].set(gamma)
        bnp = bnp.at[3 * l + 2, :out_l].set(beta)
    return w_packed, bnp


def cl_mlp_forward(x, params, activation="relu", output_activation="identity",
                   eps=_EPS):
    """Fused forward pass of cl_MLP (training-mode BatchNorm semantics)."""
    num_layers = len(params)
    # Mirror the module: the last appended activation is replaced by
    # output_activation iff activation != output_activation (net effect: the
    # last layer always uses output_activation).
    layer_acts = tuple([activation] * (num_layers - 1) + [output_activation])

    batch, in0 = x.shape
    dims = [in0] + [w.shape[1] for (w, _, _, _) in params]
    d_pad = _round_up(max(dims), _LANE)

    w_packed, bnp = _pack_params(params, d_pad)
    x_pad = jnp.zeros((batch, d_pad), jnp.float32).at[:, :in0].set(x)

    kernel = functools.partial(_fused_mlp_kernel, layer_acts=layer_acts,
                               batch=batch, eps=eps)
    out_pad = pl.pallas_call(
        kernel,
        out_shape=jax.ShapeDtypeStruct((batch, d_pad), jnp.float32),
        grid=(1,),
        in_specs=[
            pl.BlockSpec((batch, d_pad), lambda i: (0, 0)),
            pl.BlockSpec((num_layers, d_pad, d_pad), lambda i: (0, 0, 0)),
            pl.BlockSpec((3 * num_layers, d_pad), lambda i: (0, 0)),
        ],
        out_specs=pl.BlockSpec((batch, d_pad), lambda i: (0, 0)),
        compiler_params=pltpu.CompilerParams(
            dimension_semantics=("arbitrary",)),
    )(x_pad, w_packed, bnp)
    return out_pad[:, :dims[-1]]


def init_cl_mlp_params(key, in_sizes, out_sizes):
    """Deterministic parameter init mirroring the module's layer shapes.

    Linear weights are stored pre-transposed as [in, out]; b/gamma/beta are 1-D.
    """
    params = []
    for in_size, out_size in zip(in_sizes, out_sizes):
        key, kw, kb = jax.random.split(key, 3)
        bound = 1.0 / (in_size ** 0.5)
        w = jax.random.uniform(kw, (in_size, out_size), jnp.float32, -bound, bound)
        b = jax.random.uniform(kb, (out_size,), jnp.float32, -bound, bound)
        gamma = jnp.ones((out_size,), jnp.float32)    # BatchNorm1d default init
        beta = jnp.zeros((out_size,), jnp.float32)
        params.append((w, b, gamma, beta))
    return params


def _reference_forward(x, params, layer_acts, eps=_EPS):
    """Pure-JAX reference (Linear + training-mode BatchNorm1d + activation)."""
    for (w, b, gamma, beta), act in zip(params, layer_acts):
        y = x @ w + b[None, :]
        mean = jnp.mean(y, axis=0, keepdims=True)
        var = jnp.mean((y - mean) ** 2, axis=0, keepdims=True)
        y = (y - mean) / jnp.sqrt(var + eps) * gamma[None, :] + beta[None, :]
        x = _apply_activation(y, act)
    return x


if __name__ == "__main__":
    key = jax.random.PRNGKey(0)

    # cl_MLP(in_sizes=[32, 64], out_sizes=[64, 16], activation='relu')
    in_sizes = [32, 64]
    out_sizes = [64, 16]
    batch = 8

    key, kx = jax.random.split(key)
    x = jax.random.normal(kx, (batch, in_sizes[0]), jnp.float32)
    params = init_cl_mlp_params(key, in_sizes, out_sizes)

    out = cl_mlp_forward(x, params, activation="relu",
                         output_activation="identity")
    jax.block_until_ready(out)

    ref = _reference_forward(x, params, ("relu", "identity"))

    assert out.shape == (batch, out_sizes[-1])
    assert jnp.all(jnp.isfinite(out))
    assert float(jnp.max(jnp.abs(out - ref))) < 1e-2, "mismatch vs JAX reference"
    print("KERNEL_OK")
</pallas_src>

<mosaic_0001>
module attributes {stable_mosaic.version = 11 : i64} {
  func.func @_fused_mlp_kernel(%arg0: i32, %arg1: memref<8x128xf32, #tpu.memory_space<vmem>>, %arg2: memref<2x128x128xf32, #tpu.memory_space<vmem>>, %arg3: memref<6x128xf32, #tpu.memory_space<vmem>>, %arg4: memref<8x128xf32, #tpu.memory_space<vmem>>) attributes {dimension_semantics = [#tpu.dimension_semantics<arbitrary>], iteration_bounds = array<i64: 1>, scalar_prefetch = 0 : i64, scratch_operands = 0 : i64, tpu.core_type = #tpu.core_type<tc>, window_params = [{pipeline_mode = #tpu.pipeline_mode<synchronous>, transform_indices = @transform_0, window_bounds = array<i64: 8, 128>}, {pipeline_mode = #tpu.pipeline_mode<synchronous>, transform_indices = @transform_1, window_bounds = array<i64: 2, 128, 128>}, {pipeline_mode = #tpu.pipeline_mode<synchronous>, transform_indices = @transform_2, window_bounds = array<i64: 6, 128>}, {pipeline_mode = #tpu.pipeline_mode<synchronous>, transform_indices = @transform_3, window_bounds = array<i64: 8, 128>}]} {
    %c0 = arith.constant 0 : index
    %c0_0 = arith.constant 0 : index
    %0 = vector.load %arg1[%c0, %c0_0] : memref<8x128xf32, #tpu.memory_space<vmem>>, vector<8x128xf32>
    %c0_1 = arith.constant 0 : index
    %c0_2 = arith.constant 0 : index
    %1 = vector.load %arg3[%c0_1, %c0_2] : memref<6x128xf32, #tpu.memory_space<vmem>>, vector<6x128xf32>
    %2 = vector.extract_strided_slice %1 {offsets = [0, 0], sizes = [1, 128], strides = [1, 1]} : vector<6x128xf32> to vector<1x128xf32>
    %3 = vector.extract_strided_slice %1 {offsets = [1, 0], sizes = [1, 128], strides = [1, 1]} : vector<6x128xf32> to vector<1x128xf32>
    %4 = vector.extract_strided_slice %1 {offsets = [2, 0], sizes = [1, 128], strides = [1, 1]} : vector<6x128xf32> to vector<1x128xf32>
    %c0_3 = arith.constant 0 : index
    %c0_4 = arith.constant 0 : index
    %c0_5 = arith.constant 0 : index
    %5 = vector.load %arg2[%c0_3, %c0_4, %c0_5] : memref<2x128x128xf32, #tpu.memory_space<vmem>>, vector<1x128x128xf32>
    %6 = vector.shape_cast %5 : vector<1x128x128xf32> to vector<128x128xf32>
    %cst = arith.constant dense<0.000000e+00> : vector<8x128xf32>
    %7 = tpu.matmul %0, %6, %cst {dimension_numbers = #tpu.dot_dimension_numbers<[1], [0], [0], [1], [0, 0, 1, 1], [], []>} : vector<8x128xf32>, vector<128x128xf32>, vector<8x128xf32> -> vector<8x128xf32>
    %8 = vector.broadcast %2 : vector<1x128xf32> to vector<8x128xf32>
    %9 = arith.addf %7, %8 : vector<8x128xf32>
    %cst_6 = arith.constant dense<0.000000e+00> : vector<128xf32>
    %10 = vector.multi_reduction <add>, %9, %cst_6 [0] : vector<8x128xf32> to vector<128xf32>
    %11 = vector.shape_cast %10 : vector<128xf32> to vector<1x128xf32>
    %cst_7 = arith.constant 1.250000e-01 : f32
    %12 = vector.broadcast %cst_7 : f32 to vector<1x128xf32>
    %13 = arith.mulf %11, %12 : vector<1x128xf32>
    %14 = arith.mulf %9, %9 : vector<8x128xf32>
    %cst_8 = arith.constant dense<0.000000e+00> : vector<128xf32>
    %15 = vector.multi_reduction <add>, %14, %cst_8 [0] : vector<8x128xf32> to vector<128xf32>
    %16 = vector.shape_cast %15 : vector<128xf32> to vector<1x128xf32>
    %cst_9 = arith.constant 1.250000e-01 : f32
    %17 = vector.broadcast %cst_9 : f32 to vector<1x128xf32>
    %18 = arith.mulf %16, %17 : vector<1x128xf32>
    %19 = arith.mulf %13, %13 : vector<1x128xf32>
    %20 = arith.subf %18, %19 : vector<1x128xf32>
    %cst_10 = arith.constant 0.000000e+00 : f32
    %21 = vector.broadcast %cst_10 : f32 to vector<1x128xf32>
    %22 = arith.maximumf %20, %21 : vector<1x128xf32>
    %23 = vector.broadcast %13 : vector<1x128xf32> to vector<8x128xf32>
    %24 = arith.subf %9, %23 : vector<8x128xf32>
    %cst_11 = arith.constant 9.99999974E-6 : f32
    %25 = vector.broadcast %cst_11 : f32 to vector<1x128xf32>
    %26 = arith.addf %22, %25 : vector<1x128xf32>
    %27 = math.rsqrt %26 : vector<1x128xf32>
    %28 = vector.broadcast %27 : vector<1x128xf32> to vector<8x128xf32>
    %29 = arith.mulf %24, %28 : vector<8x128xf32>
    %30 = vector.broadcast %3 : vector<1x128xf32> to vector<8x128xf32>
    %31 = arith.mulf %29, %30 : vector<8x128xf32>
    %32 = vector.broadcast %4 : vector<1x128xf32> to vector<8x128xf32>
    %33 = arith.addf %31, %32 : vector<8x128xf32>
    %cst_12 = arith.constant 0.000000e+00 : f32
    %34 = vector.broadcast %cst_12 : f32 to vector<8x128xf32>
    %35 = arith.maximumf %33, %34 : vector<8x128xf32>
    %36 = vector.extract_strided_slice %1 {offsets = [3, 0], sizes = [1, 128], strides = [1, 1]} : vector<6x128xf32> to vector<1x128xf32>
    %37 = vector.extract_strided_slice %1 {offsets = [4, 0], sizes = [1, 128], strides = [1, 1]} : vector<6x128xf32> to vector<1x128xf32>
    %38 = vector.extract_strided_slice %1 {offsets = [5, 0], sizes = [1, 128], strides = [1, 1]} : vector<6x128xf32> to vector<1x128xf32>
    %c1 = arith.constant 1 : index
    %c0_13 = arith.constant 0 : index
    %c0_14 = arith.constant 0 : index
    %39 = vector.load %arg2[%c1, %c0_13, %c0_14] : memref<2x128x128xf32, #tpu.memory_space<vmem>>, vector<1x128x128xf32>
    %40 = vector.shape_cast %39 : vector<1x128x128xf32> to vector<128x128xf32>
    %cst_15 = arith.constant dense<0.000000e+00> : vector<8x128xf32>
    %41 = tpu.matmul %35, %40, %cst_15 {dimension_numbers = #tpu.dot_dimension_numbers<[1], [0], [0], [1], [0, 0, 1, 1], [], []>} : vector<8x128xf32>, vector<128x128xf32>, vector<8x128xf32> -> vector<8x128xf32>
    %42 = vector.broadcast %36 : vector<1x128xf32> to vector<8x128xf32>
    %43 = arith.addf %41, %42 : vector<8x128xf32>
    %cst_16 = arith.constant dense<0.000000e+00> : vector<128xf32>
    %44 = vector.multi_reduction <add>, %43, %cst_16 [0] : vector<8x128xf32> to vector<128xf32>
    %45 = vector.shape_cast %44 : vector<128xf32> to vector<1x128xf32>
    %cst_17 = arith.constant 1.250000e-01 : f32
    %46 = vector.broadcast %cst_17 : f32 to vector<1x128xf32>
    %47 = arith.mulf %45, %46 : vector<1x128xf32>
    %48 = arith.mulf %43, %43 : vector<8x128xf32>
    %cst_18 = arith.constant dense<0.000000e+00> : vector<128xf32>
    %49 = vector.multi_reduction <add>, %48, %cst_18 [0] : vector<8x128xf32> to vector<128xf32>
    %50 = vector.shape_cast %49 : vector<128xf32> to vector<1x128xf32>
    %cst_19 = arith.constant 1.250000e-01 : f32
    %51 = vector.broadcast %cst_19 : f32 to vector<1x128xf32>
    %52 = arith.mulf %50, %51 : vector<1x128xf32>
    %53 = arith.mulf %47, %47 : vector<1x128xf32>
    %54 = arith.subf %52, %53 : vector<1x128xf32>
    %cst_20 = arith.constant 0.000000e+00 : f32
    %55 = vector.broadcast %cst_20 : f32 to vector<1x128xf32>
    %56 = arith.maximumf %54, %55 : vector<1x128xf32>
    %57 = vector.broadcast %47 : vector<1x128xf32> to vector<8x128xf32>
    %58 = arith.subf %43, %57 : vector<8x128xf32>
    %cst_21 = arith.constant 9.99999974E-6 : f32
    %59 = vector.broadcast %cst_21 : f32 to vector<1x128xf32>
    %60 = arith.addf %56, %59 : vector<1x128xf32>
    %61 = math.rsqrt %60 : vector<1x128xf32>
    %62 = vector.broadcast %61 : vector<1x128xf32> to vector<8x128xf32>
    %63 = arith.mulf %58, %62 : vector<8x128xf32>
    %64 = vector.broadcast %37 : vector<1x128xf32> to vector<8x128xf32>
    %65 = arith.mulf %63, %64 : vector<8x128xf32>
    %66 = vector.broadcast %38 : vector<1x128xf32> to vector<8x128xf32>
    %67 = arith.addf %65, %66 : vector<8x128xf32>
    %c0_22 = arith.constant 0 : index
    %c0_23 = arith.constant 0 : index
    %68 = vector.load %arg4[%c0_22, %c0_23] : memref<8x128xf32, #tpu.memory_space<vmem>>, vector<8x128xf32>
    tpu.vector_store %arg4[%c0_22, %c0_23], %67 {strides = array<i32>} : memref<8x128xf32, #tpu.memory_space<vmem>>, vector<8x128xf32>,
    return
  }
  func.func @transform_0(%arg0: i32) -> (i32, i32) {
    %c0_i32 = arith.constant 0 : i32
    %c0_i32_0 = arith.constant 0 : i32
    %c0_i32_1 = arith.constant 0 : i32
    return %c0_i32, %c0_i32_0 : i32, i32
  }
  func.func @transform_1(%arg0: i32) -> (i32, i32, i32) {
    %c0_i32 = arith.constant 0 : i32
    %c0_i32_0 = arith.constant 0 : i32
    %c0_i32_1 = arith.constant 0 : i32
    %c0_i32_2 = arith.constant 0 : i32
    return %c0_i32, %c0_i32_0, %c0_i32_1 : i32, i32, i32
  }
  func.func @transform_2(%arg0: i32) -> (i32, i32) {
    %c0_i32 = arith.constant 0 : i32
    %c0_i32_0 = arith.constant 0 : i32
    %c0_i32_1 = arith.constant 0 : i32
    return %c0_i32, %c0_i32_0 : i32, i32
  }
  func.func @transform_3(%arg0: i32) -> (i32, i32) {
    %c0_i32 = arith.constant 0 : i32
    %c0_i32_0 = arith.constant 0 : i32
    %c0_i32_1 = arith.constant 0 : i32
    return %c0_i32, %c0_i32_0 : i32, i32
  }
}

</mosaic_0001>

<llo_original>
// kernel: tpu_custom_call.1
$region0: #{tpu_custom_call.1}
  #allocation0 [shape = 'u32[]', space=smem, size = 0x4, offset = 0x4, fixed_abs, tag = 'smem constant byte address 0x4 - core index']
  #allocation1 [shape = 'u32[72,128]{1,0:T(1,128)}', space=vmem, size = 0x9000, scoped, tag = 'internal scratch']
  %s0 = inlined_call_operand.hbm [shape: f32[8,128], index: 0, kind: input, shape index: {}]
  %s1 = inlined_call_operand.hbm [shape: f32[2,128,128], index: 1, kind: input, shape index: {}]
  %s2 = inlined_call_operand.hbm [shape: f32[6,128], index: 2, kind: input, shape index: {}]
  %s3 = inlined_call_operand.hbm [shape: f32[8,128], index: 3, kind: output, shape index: {}]
  %s4 = sld [smem:[#allocation0]]
  $region34: #{tpu_custom_call.1} parent=0
    _
  %s6 = ssub.s32 1, %s4
  %s7 = scalar_select 0, %s6, %s4
  $region1: #{tpu_custom_call.1} parent=0
    #allocation2 [shape = 'u8[4096]{0}', space=vmem, size = 0x1000, scoped, tag = 'input window, operand 0, single buffered']
    #allocation3 [shape = 's32[1]{0}', space=sflag, size = 0x4, scoped, tag = 'scoped memory for tpu_custom_call.1']
    #allocation4 [shape = 's32[1]{0}', space=sflag, size = 0x4, scoped, tag = 'scoped memory for tpu_custom_call.1']
    #allocation5 [shape = 'u8[131072]{0}', space=vmem, size = 0x20000, scoped, tag = 'input window, operand 1, single buffered']
    #allocation6 [shape = 's32[1]{0}', space=sflag, size = 0x4, scoped, tag = 'scoped memory for tpu_custom_call.1']
    #allocation7 [shape = 'u8[4096]{0}', space=vmem, size = 0x1000, scoped, tag = 'input window, operand 2, single buffered']
    #allocation8 [shape = 'u8[4096]{0}', space=vmem, size = 0x1000, scoped, tag = 'output window, operand 0, single buffered']
    %8 = vsyncpa [#allocation3], 0
    %9 = vsyncpa [#allocation6], 0
    %10 = vsyncpa [#allocation4], 0
    // Predicated region
    $region2: #{tpu_custom_call.1} parent=1 // pred_check
      _
    $region3: #{tpu_custom_call.1} parent=1 // pred_check_branch
      %12 = sbr.rel (0) target = $region5
    $region4: #{tpu_custom_call.1} parent=1 // pred_region
      %14 = vsyncadd [#allocation3], 0
      %s16 = sshll.u32 %s0, 4
      %s17 = int_to_ptr.hbm [resolvable:$true] %s16
      %s18 = sshll.u32 [#allocation2], 4
      %s19 = int_to_ptr.vmem [resolvable:$true] %s18
      %21 = dma.hbm_to_vmem [thread:$0]  %s17, 128, %s19, [#allocation3]
    $region5: #{tpu_custom_call.1} parent=1 // pred_fallthru
      _
    // Predicated region
    $region6: #{tpu_custom_call.1} parent=1 // pred_check
      _
    $region7: #{tpu_custom_call.1} parent=1 // pred_check_branch
      %23 = sbr.rel (0) target = $region9
    $region8: #{tpu_custom_call.1} parent=1 // pred_region
      %25 = vsyncadd [#allocation6], 0
      %s26 = sshll.u32 %s1, 4
      %s27 = int_to_ptr.hbm [resolvable:$true] %s26
      %s28 = sshll.u32 [#allocation5], 4
      %s29 = int_to_ptr.vmem [resolvable:$true] %s28
      %34 = dma.hbm_to_vmem [thread:$0]  %s27, 4096, %s29, [#allocation6], 128, 128, 8
    $region9: #{tpu_custom_call.1} parent=1 // pred_fallthru
      _
    // Predicated region
    $region10: #{tpu_custom_call.1} parent=1 // pred_check
      _
    $region11: #{tpu_custom_call.1} parent=1 // pred_check_branch
      %36 = sbr.rel (0) target = $region13
    $region12: #{tpu_custom_call.1} parent=1 // pred_region
      %38 = vsyncadd [#allocation6], 0
      %s40 = sshll.u32 %s2, 4
      %s41 = int_to_ptr.hbm [resolvable:$true] %s40
      %s42 = sshll.u32 [#allocation7], 4
      %s43 = int_to_ptr.vmem [resolvable:$true] %s42
      %45 = dma.hbm_to_vmem [thread:$0]  %s41, 128, %s43, [#allocation6]
    $region13: #{tpu_custom_call.1} parent=1 // pred_fallthru
      _
    // Predicated region
    $region14: #{tpu_custom_call.1} parent=1 // pred_check
      _
    $region15: #{tpu_custom_call.1} parent=1 // pred_check_branch
      %47 = sbr.rel (0) target = $region17
    $region16: #{tpu_custom_call.1} parent=1 // pred_region
      %49 = dma.done [#allocation3], 128
    $region17: #{tpu_custom_call.1} parent=1 // pred_fallthru
      _
    // Predicated region
    $region18: #{tpu_custom_call.1} parent=1 // pred_check
      _
    $region19: #{tpu_custom_call.1} parent=1 // pred_check_branch
      %51 = sbr.rel (0) target = $region21
    $region20: #{tpu_custom_call.1} parent=1 // pred_region
      %53 = dma.done [#allocation6], 4096
    $region21: #{tpu_custom_call.1} parent=1 // pred_fallthru
      _
    // Predicated region
    $region22: #{tpu_custom_call.1} parent=1 // pred_check
      _
    $region23: #{tpu_custom_call.1} parent=1 // pred_check_branch
      %55 = sbr.rel (0) target = $region25
    $region24: #{tpu_custom_call.1} parent=1 // pred_region
      %57 = dma.done [#allocation6], 128
    $region25: #{tpu_custom_call.1} parent=1 // pred_fallthru
      _
    %v58 = vld [vmem:[#allocation2] sm:$0xff]
    %v59 = vld [vmem:[#allocation7] sm:$0x3f]
    %v60 = vld [vmem:[#allocation5] sm:$0xff]
    %v61 = vld [vmem:[#allocation5 + $0x8] sm:$0xff]
    %v62 = vld [vmem:[#allocation5 + $0x10] sm:$0xff]
    %v63 = vld [vmem:[#allocation5 + $0x18] sm:$0xff]
    %v64 = vld [vmem:[#allocation5 + $0x20] sm:$0xff]
    %v65 = vld [vmem:[#allocation5 + $0x28] sm:$0xff]
    %v66 = vld [vmem:[#allocation5 + $0x30] sm:$0xff]
    %v67 = vld [vmem:[#allocation5 + $0x38] sm:$0xff]
    %v68 = vld [vmem:[#allocation5 + $0x40] sm:$0xff]
    %v69 = vld [vmem:[#allocation5 + $0x48] sm:$0xff]
    %v70 = vld [vmem:[#allocation5 + $0x50] sm:$0xff]
    %v71 = vld [vmem:[#allocation5 + $0x58] sm:$0xff]
    %v72 = vld [vmem:[#allocation5 + $0x60] sm:$0xff]
    %v73 = vld [vmem:[#allocation5 + $0x68] sm:$0xff]
    %v74 = vld [vmem:[#allocation5 + $0x70] sm:$0xff]
    %v75 = vld [vmem:[#allocation5 + $0x78] sm:$0xff]
    %v76 = vperm.slane %v59, 0
    %77 = vmatpush.msra.mxu0 %v75
    %78 = vmatpush.msra.mxu0 %v74
    %79 = vmatpush.msra.mxu0 %v73
    %80 = vmatpush.msra.mxu0 %v72
    %81 = vmatpush.msra.mxu0 %v71
    %82 = vmatpush.msra.mxu0 %v70
    %83 = vmatpush.msra.mxu0 %v69
    %84 = vmatpush.msra.mxu0 %v68
    %85 = vmatpush.msra.mxu0 %v67
    %86 = vmatpush.msra.mxu0 %v66
    %87 = vmatpush.msra.mxu0 %v65
    %88 = vmatpush.msra.mxu0 %v64
    %89 = vmatpush.msra.mxu0 %v63
    %90 = vmatpush.msra.mxu0 %v62
    %91 = vmatpush.msra.mxu0 %v61
    %92 = vmatpush.msra.mxu0 %v60
    %93 = vmatmul.f32.gmra.mxu0 %v58
    %v94 = vpop.f32.mrf.mxu0
    %v95 = vadd.f32 %v76, %v94
    %96 = vdwg.mxu0
    %v97 = vrot.slane %v95, 4
    %v98 = vadd.f32 %v95, %v97
    %v99 = vrot.slane %v98, 2
    %v100 = vadd.f32 %v98, %v99
    %v101 = vrot.slane %v100, 1
    %v102 = vadd.f32 %v100, %v101
    %v103 = vmul.f32 %v102, 0.125
    %v104 = vmul.f32 %v95, %v95
    %v105 = vrot.slane %v104, 4
    %v106 = vadd.f32 %v104, %v105
    %v107 = vrot.slane %v106, 2
    %v108 = vadd.f32 %v106, %v107
    %v109 = vrot.slane %v108, 1
    %v110 = vadd.f32 %v108, %v109
    %v111 = vmul.f32 %v110, 0.125
    %v112 = vmul.f32 %v103, %v103
    %v113 = vsub.f32 %v111, %v112
    %v114 = vmax.f32 %v113, 0.0
    %v115 = vsub.f32 %v95, %v103
    %v116 = vadd.f32 %v114, 1e-05
    %v117 = vrsqrt.pop %v116
    %v118 = vmul.f32 %v117, %v116
    %v119 = vmul.f32 %v118, %v117
    %v120 = vmul.f32 0.5, %v119
    %v121 = vsub.f32 1.5, %v120
    %v122 = vmul.f32 %v117, %v121
    %vm123 = vweird.f32 %v116
    %vm124 = vweird.f32 %v117
    %vm125 = vmor %vm123, %vm124
    %v126 = vsel %vm125, %v117, %v122
    %v127 = vmul.f32 %v115, %v126
    %v128 = vperm.slane %v59, 1
    %v129 = vmul.f32 %v127, %v128
    %v130 = vperm.slane %v59, 2
    %v131 = vadd.f32 %v129, %v130
    %v132 = vmax.f32 %v131, 0.0
    %s133 = scalar_lea.vmem [#allocation5], 128
    %v134 = vld [vmem:[%s133] sm:$0xff]
    %v135 = vld [vmem:[%s133 + $0x8] sm:$0xff]
    %v136 = vld [vmem:[%s133 + $0x10] sm:$0xff]
    %v137 = vld [vmem:[%s133 + $0x18] sm:$0xff]
    %v138 = vld [vmem:[%s133 + $0x20] sm:$0xff]
    %v139 = vld [vmem:[%s133 + $0x28] sm:$0xff]
    %v140 = vld [vmem:[%s133 + $0x30] sm:$0xff]
    %v141 = vld [vmem:[%s133 + $0x38] sm:$0xff]
    %v142 = vld [vmem:[%s133 + $0x40] sm:$0xff]
    %v143 = vld [vmem:[%s133 + $0x48] sm:$0xff]
    %v144 = vld [vmem:[%s133 + $0x50] sm:$0xff]
    %v145 = vld [vmem:[%s133 + $0x58] sm:$0xff]
    %v146 = vld [vmem:[%s133 + $0x60] sm:$0xff]
    %v147 = vld [vmem:[%s133 + $0x68] sm:$0xff]
    %v148 = vld [vmem:[%s133 + $0x70] sm:$0xff]
    %v149 = vld [vmem:[%s133 + $0x78] sm:$0xff]
    %v150 = vperm.slane %v59, 3
    %151 = vmatpush.msra.mxu0 %v149
    %152 = vmatpush.msra.mxu0 %v148
    %153 = vmatpush.msra.mxu0 %v147
    %154 = vmatpush.msra.mxu0 %v146
    %155 = vmatpush.msra.mxu0 %v145
    %156 = vmatpush.msra.mxu0 %v144
    %157 = vmatpush.msra.mxu0 %v143
    %158 = vmatpush.msra.mxu0 %v142
    %159 = vmatpush.msra.mxu0 %v141
    %160 = vmatpush.msra.mxu0 %v140
    %161 = vmatpush.msra.mxu0 %v139
    %162 = vmatpush.msra.mxu0 %v138
    %163 = vmatpush.msra.mxu0 %v137
    %164 = vmatpush.msra.mxu0 %v136
    %165 = vmatpush.msra.mxu0 %v135
    %166 = vmatpush.msra.mxu0 %v134
    %167 = vmatmul.f32.gmra.mxu0 %v132
    %v168 = vpop.f32.mrf.mxu0
    %v169 = vadd.f32 %v150, %v168
    %170 = vdwg.mxu0
    %v171 = vrot.slane %v169, 4
    %v172 = vadd.f32 %v169, %v171
    %v173 = vrot.slane %v172, 2
    %v174 = vadd.f32 %v172, %v173
    %v175 = vrot.slane %v174, 1
    %v176 = vadd.f32 %v174, %v175
    %v177 = vmul.f32 %v176, 0.125
    %v178 = vmul.f32 %v169, %v169
    %v179 = vrot.slane %v178, 4
    %v180 = vadd.f32 %v178, %v179
    %v181 = vrot.slane %v180, 2
    %v182 = vadd.f32 %v180, %v181
    %v183 = vrot.slane %v182, 1
    %v184 = vadd.f32 %v182, %v183
    %v185 = vmul.f32 %v184, 0.125
    %v186 = vmul.f32 %v177, %v177
    %v187 = vsub.f32 %v185, %v186
    %v188 = vmax.f32 %v187, 0.0
    %v189 = vsub.f32 %v169, %v177
    %v190 = vadd.f32 %v188, 1e-05
    %v191 = vrsqrt.pop %v190
    %v192 = vmul.f32 %v191, %v190
    %v193 = vmul.f32 %v192, %v191
    %v194 = vmul.f32 0.5, %v193
    %v195 = vsub.f32 1.5, %v194
    %v196 = vmul.f32 %v191, %v195
    %vm197 = vweird.f32 %v190
    %vm198 = vweird.f32 %v191
    %vm199 = vmor %vm197, %vm198
    %v200 = vsel %vm199, %v191, %v196
    %v201 = vmul.f32 %v189, %v200
    %v202 = vperm.slane %v59, 4
    %v203 = vmul.f32 %v201, %v202
    %v204 = vperm.slane %v59, 5
    %v205 = vadd.f32 %v203, %v204
    %206 = vst [vmem:[#allocation8] sm:$0xff] %v205
    // Predicated region
    $region26: #{tpu_custom_call.1} parent=1 // pred_check
      _
    $region27: #{tpu_custom_call.1} parent=1 // pred_check_branch
      %208 = sbr.rel (0) target = $region29
    $region28: #{tpu_custom_call.1} parent=1 // pred_region
      %210 = vsyncadd [#allocation4], 0
      %s212 = sshll.u32 [#allocation8], 4
      %s213 = int_to_ptr.vmem [resolvable:$true] %s212
      %s214 = sshll.u32 %s3, 4
      %s215 = int_to_ptr.hbm [resolvable:$true] %s214
      %217 = dma.vmem_to_hbm [thread:$0]  %s213, 128, %s215, [#allocation4]
    $region29: #{tpu_custom_call.1} parent=1 // pred_fallthru
      _
    // Predicated region
    $region30: #{tpu_custom_call.1} parent=1 // pred_check
      _
    $region31: #{tpu_custom_call.1} parent=1 // pred_check_branch
      %219 = sbr.rel (0) target = $region33
    $region32: #{tpu_custom_call.1} parent=1 // pred_region
      %221 = dma.done [#allocation4], 128
    $region33: #{tpu_custom_call.1} parent=1 // pred_fallthru
      _
    %222 = vsyncpa [#allocation3], 1
    %223 = vsyncpa [#allocation6], 1
    %224 = vsyncpa [#allocation4], 1

</llo_original>
